<compile_context>
chip_gen: v6e
topology: v6e:2x2x1
jax: 0.10.0
libtpu: 0.0.40
codegen_flags: <defaults>
</compile_context>

<pallas_src>
import math

import jax
import jax.numpy as jnp
import numpy as np
from jax.experimental import pallas as pl
from jax.experimental.pallas import tpu as pltpu


def _round_up(v, m):
    return ((v + m - 1) // m) * m


def _choose_block_n(n, max_bn=8192):
    """Lane-dense batch tile width.

    * wide (up to max_bn) to amortize the ~0.35 us per-grid-step overhead and
      lengthen each row-DMA segment,
    * when N > 128, capped at ~half the batch so the "parallel" grid has >= 2
      steps and both v7x TensorCores get work,
    * capped at max_bn so the f32 conv intermediate (128 x bn = 512*bn B) plus
      double-buffered inputs stay inside the v5e 16 MiB / v7x 32 MiB scoped
      VMEM budgets (we also raise vmem_limit_bytes explicitly below).
    """
    if n <= 128:
        return 128
    half = _round_up(-(-n // 2), 128)
    return max(128, min(max_bn, half))


def cnn_kernel(xt_ref, m2_ref, bcv_ref, w1_ref, b1_ref, w2_ref, b2_ref, o_ref):
    """Batch-on-lanes fused forward.

    xt_ref : (F, BN)      bf16 input tile, feature on sublanes, batch on lanes
    m2_ref : (2*C*F2, F)  bf16 folded conv matrix (even-position rows, then odd)
    bcv_ref: (C*F2, 1)    f32 per-row conv bias (channel-major)
    w1_ref : (H1, C*F2)   bf16 fc1 weight
    b1_ref : (H1, 1)      f32 fc1 bias
    w2_ref : (1, H1)      bf16 fc2 weight
    b2_ref : (1, 1)       f32 fc2 bias (SMEM scalar)
    o_ref  : (1, BN)      f32 sigmoid output (lane-dense)
    """
    x = xt_ref[...]                                                   # (F, BN) bf16

    # Conv(1x3, pad 1) for all C channels at once: one bf16 MXU matmul with
    # f32 accumulation.  Rows [0, C*F2) are the even spatial positions, rows
    # [C*F2, 2*C*F2) the odd ones (channel-major == PyTorch flatten order).
    conv = jnp.dot(m2_ref[...], x, preferred_element_type=jnp.float32)

    # Pool-first epilogue: MaxPool2d((1,2)) == max(even_half, odd_half); the
    # per-channel bias and ReLU commute with the max (ReLU is monotone and
    # both halves share the bias), so bias/ReLU touch only the pooled half.
    half = conv.shape[0] // 2
    pooled = jnp.maximum(
        jnp.maximum(conv[:half, :], conv[half:, :]) + bcv_ref[...], 0.0)  # (C*F2, BN)

    # fc1 + ReLU: single K=64 bf16 matmul, f32 accumulate, f32 elementwise.
    h1 = jnp.dot(w1_ref[...], pooled.astype(w1_ref.dtype),
                 preferred_element_type=jnp.float32)
    h1 = jnp.maximum(h1 + b1_ref[...], 0.0)                              # (H1, BN)

    # fc2 + Sigmoid, lane-dense (1, BN) store; b2 read as an SMEM scalar.
    logits = jnp.dot(w2_ref[...], h1.astype(w2_ref.dtype),
                     preferred_element_type=jnp.float32)
    o_ref[...] = jax.nn.sigmoid(logits + b2_ref[0, 0])                   # (1, BN)


def _fold_conv_pool(wc, bc, F):
    """Fold the 1x3 zero-padded conv and even/odd pool ordering into a single
    (2*C*F2, F) matrix plus a (C*F2, 1) per-row bias.  Pure function of the
    weights, computed once in the (jitted) wrapper — never inside the kernel."""
    C, K = wc.shape                  # (16, 3)
    F2 = F // 2
    wp = jnp.arange(F)[None, :]      # (1, F)

    def block(w_pos):                # w_pos: (F2,) spatial output positions
        taps = []
        for k in range(K):
            tgt = w_pos[:, None] + (k - 1)                        # (F2, 1)
            taps.append(((wp == tgt) & (tgt >= 0) & (tgt < F)).astype(jnp.float32))
        # rows ordered channel-major: row = c*F2 + j  (PyTorch flatten order)
        return jnp.einsum('ck,kjw->cjw', wc, jnp.stack(taps, 0)).reshape(C * F2, F)

    w_even = 2 * jnp.arange(F2)
    m2 = jnp.concatenate([block(w_even), block(w_even + 1)], axis=0)   # (2*C*F2, F)
    bcv = jnp.repeat(bc, F2)[:, None]                                  # (C*F2, 1)
    return m2, bcv


def cnn_forward(x, wc, bc, W1, b1, W2, b2, *, max_block_n=8192,
                x_feature_major=False):
    """x: (N, 1, 1, F) NCHW float32 (or already-transposed (F, N) if
    x_feature_major=True); weights in PyTorch conventions:
    wc: (C, 3) conv weight (squeezed (C,1,1,3)), bc: (C,),
    W1: (H1, C*(F//2)), b1: (H1,), W2: (1, H1), b2: (1,)."""
    if x_feature_major:
        F, N = x.shape
        xt = x.astype(jnp.bfloat16)                                   # (F, N)
    else:
        N = x.shape[0]
        F = x.shape[-1]
        # Cast to bf16 *before* the transpose so the one unavoidable HBM
        # re-layout pass moves half the bytes (XLA fuses cast+transpose+pad).
        # TODO(synk): callers that can produce (F, N) feature-major input
        # directly should pass x_feature_major=True and skip this pass.
        xt = x.reshape(N, F).astype(jnp.bfloat16).T                   # (F, N)
    C = wc.shape[0]
    F2 = F // 2
    H1 = W1.shape[0]

    bn = _choose_block_n(N, max_block_n)
    n_pad = _round_up(N, bn)
    if n_pad != N:
        xt = jnp.pad(xt, ((0, 0), (0, n_pad - N)))
    grid_n = n_pad // bn

    m2, bcv = _fold_conv_pool(wc.astype(jnp.float32), bc.astype(jnp.float32), F)
    m2 = m2.astype(jnp.bfloat16)                                      # matmul operands bf16
    w1 = W1.astype(jnp.bfloat16)                                      # (H1, C*F2)
    b1c = b1.astype(jnp.float32).reshape(H1, 1)
    w2 = W2.astype(jnp.bfloat16).reshape(1, H1)
    b2c = b2.astype(jnp.float32).reshape(1, 1)

    # Deeper prefetch only on the one block that changes per grid step (the
    # grid-invariant weight specs keep the default double-buffering), and only
    # when the grid is long enough for it to matter.
    if grid_n >= 3:
        x_spec = pl.BlockSpec((F, bn), lambda i: (0, i),
                              pipeline_mode=pl.Buffered(3))
    else:
        x_spec = pl.BlockSpec((F, bn), lambda i: (0, i))

    out = pl.pallas_call(
        cnn_kernel,
        out_shape=jax.ShapeDtypeStruct((1, n_pad), jnp.float32),
        grid=(grid_n,),
        in_specs=[
            x_spec,                                              # x^T tile (bf16)
            pl.BlockSpec((2 * C * F2, F), lambda i: (0, 0)),     # folded conv (bf16)
            pl.BlockSpec((C * F2, 1), lambda i: (0, 0)),         # conv bias (f32)
            pl.BlockSpec((H1, C * F2), lambda i: (0, 0)),        # fc1 weight (bf16)
            pl.BlockSpec((H1, 1), lambda i: (0, 0)),             # fc1 bias (f32)
            pl.BlockSpec((1, H1), lambda i: (0, 0)),             # fc2 weight (bf16)
            pl.BlockSpec(memory_space=pltpu.MemorySpace.SMEM),   # fc2 bias scalar
        ],
        out_specs=pl.BlockSpec((1, bn), lambda i: (0, i)),
        compiler_params=pltpu.CompilerParams(
            dimension_semantics=("parallel",),           # shards grid over v7x's 2 TCs
            vmem_limit_bytes=32 * 1024 * 1024),          # above v5e's 16 MiB scoped default
    )(xt, m2, bcv, w1, b1c, w2, b2c)

    return out[:, :N].T                                              # back to (N, 1)


def reference_forward(x, wc, bc, W1, b1, W2, b2):
    """Pure-JAX f32 reference mirroring the PyTorch forward exactly."""
    N = x.shape[0]
    F = x.shape[-1]
    C = wc.shape[0]
    xs = x.reshape(N, F)
    xp = jnp.pad(xs, ((0, 0), (1, 1)))
    cols = jnp.stack([xp[:, 0:F], xp[:, 1:F + 1], xp[:, 2:F + 2]], axis=-1)  # (N,F,3)
    conv = jnp.einsum('nwk,ck->ncw', cols, wc) + bc[None, :, None]           # (N,C,F)
    conv = jnp.maximum(conv, 0.0)
    pooled = jnp.max(conv.reshape(N, C, F // 2, 2), axis=-1)                 # (N,C,F//2)
    flat = pooled.reshape(N, C * (F // 2))                                   # channel-major
    h = jnp.maximum(flat @ W1.T + b1, 0.0)
    return jax.nn.sigmoid(h @ W2.T + b2)


if __name__ == "__main__":
    # Small shapes consistent with the module: Pima-diabetes style input_size=8.
    F, C, H1 = 8, 16, 64
    F2 = F // 2

    key = jax.random.PRNGKey(0)
    k1, k2, k3, k4, k5, k6, kx = jax.random.split(key, 7)

    # Deterministic parameter init (PyTorch-like uniform bounds, fixed keys).
    b_conv = 1.0 / math.sqrt(1 * 1 * 3)
    wc = jax.random.uniform(k1, (C, 3), jnp.float32, -b_conv, b_conv)  # (C,1,1,3) squeezed
    bc = jax.random.uniform(k2, (C,), jnp.float32, -b_conv, b_conv)
    b_fc1 = 1.0 / math.sqrt(C * F2)
    W1 = jax.random.uniform(k3, (H1, C * F2), jnp.float32, -b_fc1, b_fc1)
    b1 = jax.random.uniform(k4, (H1,), jnp.float32, -b_fc1, b_fc1)
    b_fc2 = 1.0 / math.sqrt(H1)
    W2 = jax.random.uniform(k5, (1, H1), jnp.float32, -b_fc2, b_fc2)
    b2 = jax.random.uniform(k6, (1,), jnp.float32, -b_fc2, b_fc2)

    fwd = jax.jit(cnn_forward)
    for i, N in enumerate((4, 300)):   # grid=1, and grid=2 with batch padding
        kxi = jax.random.fold_in(kx, i)
        x = jax.random.normal(kxi, (N, 1, 1, F), dtype=jnp.float32)

        out = jax.block_until_ready(fwd(x, wc, bc, W1, b1, W2, b2))
        ref = jax.block_until_ready(reference_forward(x, wc, bc, W1, b1, W2, b2))

        # bf16 matmul operands (f32 accumulate) vs f32 reference -> relaxed tol.
        np.testing.assert_allclose(np.asarray(out), np.asarray(ref),
                                   rtol=2e-2, atol=2e-2)

    print("KERNEL_OK")
</pallas_src>

<mosaic_0001>
module attributes {stable_mosaic.version = 11 : i64} {
  func.func @cnn_kernel(%arg0: i32, %arg1: memref<8x128xbf16, #tpu.memory_space<vmem>>, %arg2: memref<128x8xbf16, #tpu.memory_space<vmem>>, %arg3: memref<64x1xf32, #tpu.memory_space<vmem>>, %arg4: memref<64x64xbf16, #tpu.memory_space<vmem>>, %arg5: memref<64x1xf32, #tpu.memory_space<vmem>>, %arg6: memref<1x64xbf16, #tpu.memory_space<vmem>>, %arg7: memref<1x1xf32, #tpu.memory_space<smem>>, %arg8: memref<1x128xf32, #tpu.memory_space<vmem>>) attributes {dimension_semantics = [#tpu.dimension_semantics<parallel>], iteration_bounds = array<i64: 1>, scalar_prefetch = 0 : i64, scratch_operands = 0 : i64, tpu.core_type = #tpu.core_type<tc>, window_params = [{transform_indices = @transform_0, window_bounds = array<i64: 8, 128>}, {pipeline_mode = #tpu.pipeline_mode<synchronous>, transform_indices = @transform_1, window_bounds = array<i64: 128, 8>}, {pipeline_mode = #tpu.pipeline_mode<synchronous>, transform_indices = @transform_2, window_bounds = array<i64: 64, 1>}, {pipeline_mode = #tpu.pipeline_mode<synchronous>, transform_indices = @transform_3, window_bounds = array<i64: 64, 64>}, {pipeline_mode = #tpu.pipeline_mode<synchronous>, transform_indices = @transform_4, window_bounds = array<i64: 64, 1>}, {pipeline_mode = #tpu.pipeline_mode<synchronous>, transform_indices = @transform_5, window_bounds = array<i64: 1, 64>}, {transform_indices = @transform_6, window_bounds = array<i64: 1, 1>}, {transform_indices = @transform_7, window_bounds = array<i64: 1, 128>}]} {
    %c0 = arith.constant 0 : index
    %c0_0 = arith.constant 0 : index
    %0 = vector.load %arg1[%c0, %c0_0] : memref<8x128xbf16, #tpu.memory_space<vmem>>, vector<8x128xbf16>
    %c0_1 = arith.constant 0 : index
    %c0_2 = arith.constant 0 : index
    %1 = vector.load %arg2[%c0_1, %c0_2] : memref<128x8xbf16, #tpu.memory_space<vmem>>, vector<128x8xbf16>
    %cst = arith.constant dense<0.000000e+00> : vector<128x128xf32>
    %2 = tpu.matmul %1, %0, %cst {dimension_numbers = #tpu.dot_dimension_numbers<[1], [0], [0], [1], [0, 0, 1, 1], [], []>} : vector<128x8xbf16>, vector<8x128xbf16>, vector<128x128xf32> -> vector<128x128xf32>
    %3 = vector.extract_strided_slice %2 {offsets = [0, 0], sizes = [64, 128], strides = [1, 1]} : vector<128x128xf32> to vector<64x128xf32>
    %4 = vector.extract_strided_slice %2 {offsets = [64, 0], sizes = [64, 128], strides = [1, 1]} : vector<128x128xf32> to vector<64x128xf32>
    %5 = arith.maximumf %3, %4 : vector<64x128xf32>
    %c0_3 = arith.constant 0 : index
    %c0_4 = arith.constant 0 : index
    %6 = vector.load %arg3[%c0_3, %c0_4] : memref<64x1xf32, #tpu.memory_space<vmem>>, vector<64x1xf32>
    %7 = vector.broadcast %6 : vector<64x1xf32> to vector<64x128xf32>
    %8 = arith.addf %5, %7 : vector<64x128xf32>
    %cst_5 = arith.constant 0.000000e+00 : f32
    %9 = vector.broadcast %cst_5 : f32 to vector<64x128xf32>
    %10 = arith.maximumf %8, %9 : vector<64x128xf32>
    %c0_6 = arith.constant 0 : index
    %c0_7 = arith.constant 0 : index
    %11 = vector.load %arg4[%c0_6, %c0_7] : memref<64x64xbf16, #tpu.memory_space<vmem>>, vector<64x64xbf16>
    %12 = arith.truncf %10 : vector<64x128xf32> to vector<64x128xbf16>
    %cst_8 = arith.constant dense<0.000000e+00> : vector<64x128xf32>
    %13 = tpu.matmul %11, %12, %cst_8 {dimension_numbers = #tpu.dot_dimension_numbers<[1], [0], [0], [1], [0, 0, 1, 1], [], []>} : vector<64x64xbf16>, vector<64x128xbf16>, vector<64x128xf32> -> vector<64x128xf32>
    %c0_9 = arith.constant 0 : index
    %c0_10 = arith.constant 0 : index
    %14 = vector.load %arg5[%c0_9, %c0_10] : memref<64x1xf32, #tpu.memory_space<vmem>>, vector<64x1xf32>
    %15 = vector.broadcast %14 : vector<64x1xf32> to vector<64x128xf32>
    %16 = arith.addf %13, %15 : vector<64x128xf32>
    %cst_11 = arith.constant 0.000000e+00 : f32
    %17 = vector.broadcast %cst_11 : f32 to vector<64x128xf32>
    %18 = arith.maximumf %16, %17 : vector<64x128xf32>
    %c0_12 = arith.constant 0 : index
    %c0_13 = arith.constant 0 : index
    %19 = vector.load %arg6[%c0_12, %c0_13] : memref<1x64xbf16, #tpu.memory_space<vmem>>, vector<1x64xbf16>
    %20 = arith.truncf %18 : vector<64x128xf32> to vector<64x128xbf16>
    %cst_14 = arith.constant dense<0.000000e+00> : vector<1x128xf32>
    %21 = tpu.matmul %19, %20, %cst_14 {dimension_numbers = #tpu.dot_dimension_numbers<[1], [0], [0], [1], [0, 0, 1, 1], [], []>} : vector<1x64xbf16>, vector<64x128xbf16>, vector<1x128xf32> -> vector<1x128xf32>
    %c0_15 = arith.constant 0 : index
    %c0_16 = arith.constant 0 : index
    %22 = memref.load %arg7[%c0_15, %c0_16] : memref<1x1xf32, #tpu.memory_space<smem>>
    %23 = vector.broadcast %22 : f32 to vector<1x128xf32>
    %24 = arith.addf %21, %23 : vector<1x128xf32>
    %25 = arith.negf %24 : vector<1x128xf32>
    %26 = math.exp %25 : vector<1x128xf32>
    %cst_17 = arith.constant 1.000000e+00 : f32
    %27 = vector.broadcast %cst_17 : f32 to vector<1x128xf32>
    %28 = arith.addf %27, %26 : vector<1x128xf32>
    %29 = arith.divf %27, %28 : vector<1x128xf32>
    %c0_18 = arith.constant 0 : index
    %c0_19 = arith.constant 0 : index
    %30 = vector.load %arg8[%c0_18, %c0_19] : memref<1x128xf32, #tpu.memory_space<vmem>>, vector<1x128xf32>
    tpu.vector_store %arg8[%c0_18, %c0_19], %29 {strides = array<i32>} : memref<1x128xf32, #tpu.memory_space<vmem>>, vector<1x128xf32>,
    return
  }
  func.func @transform_0(%arg0: i32) -> (i32, i32) {
    %c0_i32 = arith.constant 0 : i32
    %c0_i32_0 = arith.constant 0 : i32
    return %c0_i32, %arg0 : i32, i32
  }
  func.func @transform_1(%arg0: i32) -> (i32, i32) {
    %c0_i32 = arith.constant 0 : i32
    %c0_i32_0 = arith.constant 0 : i32
    %c0_i32_1 = arith.constant 0 : i32
    return %c0_i32, %c0_i32_0 : i32, i32
  }
  func.func @transform_2(%arg0: i32) -> (i32, i32) {
    %c0_i32 = arith.constant 0 : i32
    %c0_i32_0 = arith.constant 0 : i32
    %c0_i32_1 = arith.constant 0 : i32
    return %c0_i32, %c0_i32_0 : i32, i32
  }
  func.func @transform_3(%arg0: i32) -> (i32, i32) {
    %c0_i32 = arith.constant 0 : i32
    %c0_i32_0 = arith.constant 0 : i32
    %c0_i32_1 = arith.constant 0 : i32
    return %c0_i32, %c0_i32_0 : i32, i32
  }
  func.func @transform_4(%arg0: i32) -> (i32, i32) {
    %c0_i32 = arith.constant 0 : i32
    %c0_i32_0 = arith.constant 0 : i32
    %c0_i32_1 = arith.constant 0 : i32
    return %c0_i32, %c0_i32_0 : i32, i32
  }
  func.func @transform_5(%arg0: i32) -> (i32, i32) {
    %c0_i32 = arith.constant 0 : i32
    %c0_i32_0 = arith.constant 0 : i32
    %c0_i32_1 = arith.constant 0 : i32
    return %c0_i32, %c0_i32_0 : i32, i32
  }
  func.func @transform_6(%arg0: i32) -> (i32, i32) {
    %c0_i32 = arith.constant 0 : i32
    %c0_i32_0 = arith.constant 0 : i32
    %c0_i32_1 = arith.constant 0 : i32
    return %c0_i32, %c0_i32_0 : i32, i32
  }
  func.func @transform_7(%arg0: i32) -> (i32, i32) {
    %c0_i32 = arith.constant 0 : i32
    %c0_i32_0 = arith.constant 0 : i32
    return %c0_i32, %arg0 : i32, i32
  }
}

</mosaic_0001>

<llo_original>
// kernel: cnn_forward.1
$region0: #{cnn_forward.1}
  #allocation0 [shape = 'u32[]', space=smem, size = 0x4, offset = 0x4, fixed_abs, tag = 'smem constant byte address 0x4 - core index']
  #allocation1 [shape = 'u32[144,128]{1,0:T(1,128)}', space=vmem, size = 0x12000, scoped, tag = 'internal scratch']
  #allocation2 [shape = 'f32[1,1]{1,0:T(1,128)S(6)}', space=smem, size = 0x200, scoped, tag = 'scoped memory for cnn_forward.1']
  %s0 = inlined_call_operand.vmem [shape: bf16[8,128], index: 0, kind: input, shape index: {}]
  %s1 = inlined_call_operand.vmem [shape: bf16[128,8], index: 1, kind: input, shape index: {}]
  %s2 = inlined_call_operand.vmem [shape: f32[64,1], index: 2, kind: input, shape index: {}]
  %s3 = inlined_call_operand.vmem [shape: bf16[64,64], index: 3, kind: input, shape index: {}]
  %s4 = inlined_call_operand.vmem [shape: f32[64,1], index: 4, kind: input, shape index: {}]
  %s5 = inlined_call_operand.vmem [shape: bf16[1,64], index: 5, kind: input, shape index: {}]
  %s6 = inlined_call_operand.<no memory space> [shape: f32[1,1], index: 6, kind: input, shape index: {}]
  %s7 = inlined_call_operand.vmem [shape: f32[1,128], index: 7, kind: output, shape index: {}]
  %s8 = sld [smem:[#allocation0]]
  $region38: #{cnn_forward.1} parent=0
    _
  %s10 = ssub.s32 1, %s8
  %s11 = scalar_select 0, %s10, %s8
  %12 = sst [smem:[#allocation2]] %s6
  // Predicated region
  $region2: #{cnn_forward.1} parent=0 // pred_check
    _
  $region3: #{cnn_forward.1} parent=0 // pred_check_branch
    %14 = sbr.rel (0) target = $region5
  $region4: #{cnn_forward.1} parent=0 // pred_region
    _
  $region5: #{cnn_forward.1} parent=0 // pred_fallthru
    _
  // Predicated region
  $region6: #{cnn_forward.1} parent=0 // pred_check
    _
  $region7: #{cnn_forward.1} parent=0 // pred_check_branch
    %16 = sbr.rel (0) target = $region9
  $region8: #{cnn_forward.1} parent=0 // pred_region
    _
  $region9: #{cnn_forward.1} parent=0 // pred_fallthru
    _
  // Predicated region
  $region10: #{cnn_forward.1} parent=0 // pred_check
    _
  $region11: #{cnn_forward.1} parent=0 // pred_check_branch
    %18 = sbr.rel (0) target = $region13
  $region12: #{cnn_forward.1} parent=0 // pred_region
    _
  $region13: #{cnn_forward.1} parent=0 // pred_fallthru
    _
  // Predicated region
  $region14: #{cnn_forward.1} parent=0 // pred_check
    _
  $region15: #{cnn_forward.1} parent=0 // pred_check_branch
    %20 = sbr.rel (0) target = $region17
  $region16: #{cnn_forward.1} parent=0 // pred_region
    _
  $region17: #{cnn_forward.1} parent=0 // pred_fallthru
    _
  // Predicated region
  $region18: #{cnn_forward.1} parent=0 // pred_check
    _
  $region19: #{cnn_forward.1} parent=0 // pred_check_branch
    %22 = sbr.rel (0) target = $region21
  $region20: #{cnn_forward.1} parent=0 // pred_region
    _
  $region21: #{cnn_forward.1} parent=0 // pred_fallthru
    _
  // Predicated region
  $region22: #{cnn_forward.1} parent=0 // pred_check
    _
  $region23: #{cnn_forward.1} parent=0 // pred_check_branch
    %24 = sbr.rel (0) target = $region25
  $region24: #{cnn_forward.1} parent=0 // pred_region
    _
  $region25: #{cnn_forward.1} parent=0 // pred_fallthru
    _
  // Predicated region
  $region26: #{cnn_forward.1} parent=0 // pred_check
    _
  $region27: #{cnn_forward.1} parent=0 // pred_check_branch
    %26 = sbr.rel (0) target = $region29
  $region28: #{cnn_forward.1} parent=0 // pred_region
    _
  $region29: #{cnn_forward.1} parent=0 // pred_fallthru
    _
  %v28 = vld [vmem:[%s0] sm:$0xf]
  %v29 = vld [vmem:[%s1] sm:$0xf]
  %v30 = vld [vmem:[%s1 + $0x4] sm:$0xf]
  %v31 = vld [vmem:[%s1 + $0x8] sm:$0xf]
  %v32 = vld [vmem:[%s1 + $0xc] sm:$0xf]
  %v33 = vld [vmem:[%s1 + $0x10] sm:$0xf]
  %v34 = vld [vmem:[%s1 + $0x14] sm:$0xf]
  %v35 = vld [vmem:[%s1 + $0x18] sm:$0xf]
  %v36 = vld [vmem:[%s1 + $0x1c] sm:$0xf]
  %v37 = vld [vmem:[%s1 + $0x20] sm:$0xf]
  %v38 = vld [vmem:[%s1 + $0x24] sm:$0xf]
  %v39 = vld [vmem:[%s1 + $0x28] sm:$0xf]
  %v40 = vld [vmem:[%s1 + $0x2c] sm:$0xf]
  %v41 = vld [vmem:[%s1 + $0x30] sm:$0xf]
  %v42 = vld [vmem:[%s1 + $0x34] sm:$0xf]
  %v43 = vld [vmem:[%s1 + $0x38] sm:$0xf]
  %v44 = vld [vmem:[%s1 + $0x3c] sm:$0xf]
  %v61 = vunpack.c.l.b16 %v29
  %v62 = vunpack.c.l.b16 %v30
  %v63 = vunpack.c.l.b16 %v31
  %v64 = vunpack.c.l.b16 %v32
  %v65 = vunpack.c.l.b16 %v33
  %v66 = vunpack.c.l.b16 %v34
  %v67 = vunpack.c.l.b16 %v35
  %v68 = vunpack.c.l.b16 %v36
  %v69 = vunpack.c.l.b16 %v37
  %v70 = vunpack.c.l.b16 %v38
  %v71 = vunpack.c.l.b16 %v39
  %v72 = vunpack.c.l.b16 %v40
  %v73 = vunpack.c.l.b16 %v41
  %v74 = vunpack.c.l.b16 %v42
  %v75 = vunpack.c.l.b16 %v43
  %v76 = vunpack.c.l.b16 %v44
  %v77 = vpack.c.b16 %v62, %v61
  %v78 = vpack.c.b16 %v64, %v63
  %v79 = vpack.c.b16 %v66, %v65
  %v80 = vpack.c.b16 %v68, %v67
  %v81 = vpack.c.b16 %v70, %v69
  %v82 = vpack.c.b16 %v72, %v71
  %v83 = vpack.c.b16 %v74, %v73
  %v84 = vpack.c.b16 %v76, %v75
  %vm85 = vcmask 64512
  %v87 = vsel %vm85, %v77, 0
  %v90 = vsel %vm85, %v78, 0
  %v93 = vsel %vm85, %v79, 0
  %v96 = vsel %vm85, %v80, 0
  %v99 = vsel %vm85, %v81, 0
  %v102 = vsel %vm85, %v82, 0
  %v105 = vsel %vm85, %v83, 0
  %v108 = vsel %vm85, %v84, 0
  %vm110 = vcmask 1043456
  %v112 = vsel %vm110, %v28, 0
  %114 = vmatprep.subr.bf16.mxu0 0
  %115 = vmatpush1.bf16.msra.mxu0 0
  %116 = vmatprep.subr.bf16.mxu0 0
  %117 = vmatpush1.bf16.msra.mxu0 0
  %118 = vmatprep.subr.bf16.mxu0 0
  %119 = vmatpush1.bf16.msra.mxu0 0
  %120 = vmatprep.subr.bf16.mxu0 0
  %121 = vmatpush1.bf16.msra.mxu0 0
  %122 = vmatprep.subr.bf16.mxu0 0
  %123 = vmatpush1.bf16.msra.mxu0 0
  %124 = vmatprep.subr.bf16.mxu0 0
  %125 = vmatpush1.bf16.msra.mxu0 0
  %126 = vmatprep.subr.bf16.mxu0 0
  %127 = vmatpush1.bf16.msra.mxu0 0
  %128 = vmatprep.subr.bf16.mxu0 0
  %129 = vmatpush1.bf16.msra.mxu0 %v112
  %130 = vmatprep.subr.bf16.mxu0 0
  %131 = vmatpush2.bf16.msra.mxu0 0
  %132 = vmatprep.subr.bf16.mxu0 0
  %133 = vmatpush2.bf16.msra.mxu0 0
  %134 = vmatprep.subr.bf16.mxu0 0
  %135 = vmatpush2.bf16.msra.mxu0 0
  %136 = vmatprep.subr.bf16.mxu0 0
  %137 = vmatpush2.bf16.msra.mxu0 0
  %138 = vmatprep.subr.bf16.mxu0 0
  %139 = vmatpush2.bf16.msra.mxu0 0
  %140 = vmatprep.subr.bf16.mxu0 0
  %141 = vmatpush2.bf16.msra.mxu0 0
  %142 = vmatprep.subr.bf16.mxu0 0
  %143 = vmatpush2.bf16.msra.mxu0 0
  %144 = vmatprep.subr.bf16.mxu0 0
  %145 = vmatpush2.bf16.msra.mxu0 0
  %146 = vmatprep.mubr.bf16.mxu0 0
  %147 = vmatmul.mubr.bf16.gmra.mxu0 %v87
  %v148 = vpop.f32.mrf.mxu0
  %v149 = vadd.f32 0.0, %v148
  %v150 = vpop.f32.mrf.mxu0
  %v151 = vpop.f32.mrf.mxu0
  %v152 = vadd.f32 0.0, %v151
  %v153 = vpop.f32.mrf.mxu0
  %154 = vmatprep.mubr.bf16.mxu0 0
  %155 = vmatmul.mubr.bf16.gmra.mxu0 %v90
  %v156 = vpop.f32.mrf.mxu0
  %v157 = vadd.f32 0.0, %v156
  %v158 = vpop.f32.mrf.mxu0
  %v159 = vpop.f32.mrf.mxu0
  %v160 = vadd.f32 0.0, %v159
  %v161 = vpop.f32.mrf.mxu0
  %162 = vmatprep.mubr.bf16.mxu0 0
  %163 = vmatmul.mubr.bf16.gmra.mxu0 %v93
  %v164 = vpop.f32.mrf.mxu0
  %v165 = vadd.f32 0.0, %v164
  %v166 = vpop.f32.mrf.mxu0
  %v167 = vpop.f32.mrf.mxu0
  %v168 = vadd.f32 0.0, %v167
  %v169 = vpop.f32.mrf.mxu0
  %170 = vmatprep.mubr.bf16.mxu0 0
  %171 = vmatmul.mubr.bf16.gmra.mxu0 %v96
  %v172 = vpop.f32.mrf.mxu0
  %v173 = vadd.f32 0.0, %v172
  %v174 = vpop.f32.mrf.mxu0
  %v175 = vpop.f32.mrf.mxu0
  %v176 = vadd.f32 0.0, %v175
  %v177 = vpop.f32.mrf.mxu0
  %178 = vmatprep.mubr.bf16.mxu0 0
  %179 = vmatmul.mubr.bf16.gmra.mxu0 %v99
  %v180 = vpop.f32.mrf.mxu0
  %v181 = vadd.f32 0.0, %v180
  %v182 = vpop.f32.mrf.mxu0
  %v183 = vpop.f32.mrf.mxu0
  %v184 = vadd.f32 0.0, %v183
  %v185 = vpop.f32.mrf.mxu0
  %186 = vmatprep.mubr.bf16.mxu0 0
  %187 = vmatmul.mubr.bf16.gmra.mxu0 %v102
  %v188 = vpop.f32.mrf.mxu0
  %v189 = vadd.f32 0.0, %v188
  %v190 = vpop.f32.mrf.mxu0
  %v191 = vpop.f32.mrf.mxu0
  %v192 = vadd.f32 0.0, %v191
  %v193 = vpop.f32.mrf.mxu0
  %194 = vmatprep.mubr.bf16.mxu0 0
  %195 = vmatmul.mubr.bf16.gmra.mxu0 %v105
  %v196 = vpop.f32.mrf.mxu0
  %v197 = vadd.f32 0.0, %v196
  %v198 = vpop.f32.mrf.mxu0
  %v199 = vpop.f32.mrf.mxu0
  %v200 = vadd.f32 0.0, %v199
  %v201 = vpop.f32.mrf.mxu0
  %202 = vmatprep.mubr.bf16.mxu0 0
  %203 = vmatmul.mubr.bf16.gmra.mxu0 %v108
  %v204 = vpop.f32.mrf.mxu0
  %v205 = vadd.f32 0.0, %v204
  %v206 = vpop.f32.mrf.mxu0
  %v207 = vpop.f32.mrf.mxu0
  %v208 = vadd.f32 0.0, %v207
  %v209 = vpop.f32.mrf.mxu0
  %210 = vdwg.mxu0
  %v211 = vmax.f32 %v149, %v181
  %v212 = vmax.f32 %v152, %v184
  %v213 = vmax.f32 %v157, %v189
  %v214 = vmax.f32 %v160, %v192
  %v215 = vmax.f32 %v165, %v197
  %v216 = vmax.f32 %v168, %v200
  %v217 = vmax.f32 %v173, %v205
  %v218 = vmax.f32 %v176, %v208
  %v219 = vld [vmem:[%s2] sm:$0xff]
  %v220 = vld [vmem:[%s2 + $0x8] sm:$0xff]
  %v221 = vld [vmem:[%s2 + $0x10] sm:$0xff]
  %v222 = vld [vmem:[%s2 + $0x18] sm:$0xff]
  %v223 = vld [vmem:[%s2 + $0x20] sm:$0xff]
  %v224 = vld [vmem:[%s2 + $0x28] sm:$0xff]
  %v225 = vld [vmem:[%s2 + $0x30] sm:$0xff]
  %v226 = vld [vmem:[%s2 + $0x38] sm:$0xff]
  %228 = vset.pattern.permute.xlu0 0
  %229 = vperm.xlu0 %228, %v219
  %v230 = vpop.permute.xlu0 %229
  %233 = vset.pattern.permute.xlu0 0
  %234 = vperm.xlu0 %233, %v220
  %v235 = vpop.permute.xlu0 %234
  %238 = vset.pattern.permute.xlu0 0
  %239 = vperm.xlu0 %238, %v221
  %v240 = vpop.permute.xlu0 %239
  %243 = vset.pattern.permute.xlu0 0
  %244 = vperm.xlu0 %243, %v222
  %v245 = vpop.permute.xlu0 %244
  %248 = vset.pattern.permute.xlu0 0
  %249 = vperm.xlu0 %248, %v223
  %v250 = vpop.permute.xlu0 %249
  %253 = vset.pattern.permute.xlu0 0
  %254 = vperm.xlu0 %253, %v224
  %v255 = vpop.permute.xlu0 %254
  %258 = vset.pattern.permute.xlu0 0
  %259 = vperm.xlu0 %258, %v225
  %v260 = vpop.permute.xlu0 %259
  %263 = vset.pattern.permute.xlu0 0
  %264 = vperm.xlu0 %263, %v226
  %v265 = vpop.permute.xlu0 %264
  %v267 = vadd.f32 %v211, %v230
  %v268 = vadd.f32 %v212, %v235
  %v269 = vadd.f32 %v213, %v240
  %v270 = vadd.f32 %v214, %v245
  %v271 = vadd.f32 %v215, %v250
  %v272 = vadd.f32 %v216, %v255
  %v273 = vadd.f32 %v217, %v260
  %v274 = vadd.f32 %v218, %v265
  %v275 = vmax.f32 %v267, 0.0
  %v276 = vmax.f32 %v268, 0.0
  %v277 = vmax.f32 %v269, 0.0
  %v278 = vmax.f32 %v270, 0.0
  %v279 = vmax.f32 %v271, 0.0
  %v280 = vmax.f32 %v272, 0.0
  %v281 = vmax.f32 %v273, 0.0
  %v282 = vmax.f32 %v274, 0.0
  %v283 = vld [vmem:[%s3] sm:$0xf]
  %v284 = vld [vmem:[%s3 + $0x4] sm:$0xf]
  %v285 = vld [vmem:[%s3 + $0x8] sm:$0xf]
  %v286 = vld [vmem:[%s3 + $0xc] sm:$0xf]
  %v287 = vld [vmem:[%s3 + $0x10] sm:$0xf]
  %v288 = vld [vmem:[%s3 + $0x14] sm:$0xf]
  %v289 = vld [vmem:[%s3 + $0x18] sm:$0xf]
  %v290 = vld [vmem:[%s3 + $0x1c] sm:$0xf]
  %v291 = vpack.c.bf16 %v276, %v275
  %v292 = vpack.c.bf16 %v278, %v277
  %v293 = vpack.c.bf16 %v280, %v279
  %v294 = vpack.c.bf16 %v282, %v281
  %v295 = vld [vmem:[%s4] sm:$0xff]
  %v296 = vld [vmem:[%s4 + $0x8] sm:$0xff]
  %v297 = vld [vmem:[%s4 + $0x10] sm:$0xff]
  %v298 = vld [vmem:[%s4 + $0x18] sm:$0xff]
  %v299 = vld [vmem:[%s4 + $0x20] sm:$0xff]
  %v300 = vld [vmem:[%s4 + $0x28] sm:$0xff]
  %v301 = vld [vmem:[%s4 + $0x30] sm:$0xff]
  %v302 = vld [vmem:[%s4 + $0x38] sm:$0xff]
  %304 = vset.pattern.permute.xlu0 0
  %305 = vperm.xlu0 %304, %v295
  %v306 = vpop.permute.xlu0 %305
  %309 = vset.pattern.permute.xlu0 0
  %310 = vperm.xlu0 %309, %v296
  %v311 = vpop.permute.xlu0 %310
  %314 = vset.pattern.permute.xlu0 0
  %315 = vperm.xlu0 %314, %v297
  %v316 = vpop.permute.xlu0 %315
  %319 = vset.pattern.permute.xlu0 0
  %320 = vperm.xlu0 %319, %v298
  %v321 = vpop.permute.xlu0 %320
  %324 = vset.pattern.permute.xlu0 0
  %325 = vperm.xlu0 %324, %v299
  %v326 = vpop.permute.xlu0 %325
  %329 = vset.pattern.permute.xlu0 0
  %330 = vperm.xlu0 %329, %v300
  %v331 = vpop.permute.xlu0 %330
  %334 = vset.pattern.permute.xlu0 0
  %335 = vperm.xlu0 %334, %v301
  %v336 = vpop.permute.xlu0 %335
  %339 = vset.pattern.permute.xlu0 0
  %340 = vperm.xlu0 %339, %v302
  %v341 = vpop.permute.xlu0 %340
  %v351 = vunpack.c.l.b16 %v283
  %v352 = vunpack.c.l.b16 %v284
  %v353 = vunpack.c.l.b16 %v285
  %v354 = vunpack.c.l.b16 %v286
  %v355 = vunpack.c.l.b16 %v287
  %v356 = vunpack.c.l.b16 %v288
  %v357 = vunpack.c.l.b16 %v289
  %v358 = vunpack.c.l.b16 %v290
  %v359 = vpack.c.b16 %v352, %v351
  %v360 = vpack.c.b16 %v354, %v353
  %v361 = vpack.c.b16 %v356, %v355
  %v362 = vpack.c.b16 %v358, %v357
  %vm363 = vcmask 523264
  %v365 = vsel %vm363, %v359, 0
  %v368 = vsel %vm363, %v360, 0
  %v371 = vsel %vm363, %v361, 0
  %v374 = vsel %vm363, %v362, 0
  %376 = vmatprep.subr.bf16.mxu0 0
  %377 = vmatpush1.bf16.msra.mxu0 0
  %378 = vmatprep.subr.bf16.mxu0 0
  %379 = vmatpush1.bf16.msra.mxu0 0
  %380 = vmatprep.subr.bf16.mxu0 0
  %381 = vmatpush1.bf16.msra.mxu0 0
  %382 = vmatprep.subr.bf16.mxu0 0
  %383 = vmatpush1.bf16.msra.mxu0 0
  %384 = vmatprep.subr.bf16.mxu0 0
  %385 = vmatpush1.bf16.msra.mxu0 %v294
  %386 = vmatprep.subr.bf16.mxu0 0
  %387 = vmatpush1.bf16.msra.mxu0 %v293
  %388 = vmatprep.subr.bf16.mxu0 0
  %389 = vmatpush1.bf16.msra.mxu0 %v292
  %390 = vmatprep.subr.bf16.mxu0 0
  %391 = vmatpush1.bf16.msra.mxu0 %v291
  %392 = vmatprep.subr.bf16.mxu0 0
  %393 = vmatpush2.bf16.msra.mxu0 0
  %394 = vmatprep.subr.bf16.mxu0 0
  %395 = vmatpush2.bf16.msra.mxu0 0
  %396 = vmatprep.subr.bf16.mxu0 0
  %397 = vmatpush2.bf16.msra.mxu0 0
  %398 = vmatprep.subr.bf16.mxu0 0
  %399 = vmatpush2.bf16.msra.mxu0 0
  %400 = vmatprep.subr.bf16.mxu0 0
  %401 = vmatpush2.bf16.msra.mxu0 0
  %402 = vmatprep.subr.bf16.mxu0 0
  %403 = vmatpush2.bf16.msra.mxu0 0
  %404 = vmatprep.subr.bf16.mxu0 0
  %405 = vmatpush2.bf16.msra.mxu0 0
  %406 = vmatprep.subr.bf16.mxu0 0
  %407 = vmatpush2.bf16.msra.mxu0 0
  %408 = vmatprep.mubr.bf16.mxu0 0
  %409 = vmatmul.mubr.bf16.gmra.mxu0 %v365
  %v410 = vpop.f32.mrf.mxu0
  %v411 = vadd.f32 %v306, %v410
  %v412 = vpop.f32.mrf.mxu0
  %v413 = vpop.f32.mrf.mxu0
  %v414 = vadd.f32 %v311, %v413
  %v415 = vpop.f32.mrf.mxu0
  %416 = vmatprep.mubr.bf16.mxu0 0
  %417 = vmatmul.mubr.bf16.gmra.mxu0 %v368
  %v418 = vpop.f32.mrf.mxu0
  %v419 = vadd.f32 %v316, %v418
  %v420 = vpop.f32.mrf.mxu0
  %v421 = vpop.f32.mrf.mxu0
  %v422 = vadd.f32 %v321, %v421
  %v423 = vpop.f32.mrf.mxu0
  %424 = vmatprep.mubr.bf16.mxu0 0
  %425 = vmatmul.mubr.bf16.gmra.mxu0 %v371
  %v426 = vpop.f32.mrf.mxu0
  %v427 = vadd.f32 %v326, %v426
  %v428 = vpop.f32.mrf.mxu0
  %v429 = vpop.f32.mrf.mxu0
  %v430 = vadd.f32 %v331, %v429
  %v431 = vpop.f32.mrf.mxu0
  %432 = vmatprep.mubr.bf16.mxu0 0
  %433 = vmatmul.mubr.bf16.gmra.mxu0 %v374
  %v434 = vpop.f32.mrf.mxu0
  %v435 = vadd.f32 %v336, %v434
  %v436 = vpop.f32.mrf.mxu0
  %v437 = vpop.f32.mrf.mxu0
  %v438 = vadd.f32 %v341, %v437
  %v439 = vpop.f32.mrf.mxu0
  %440 = vdwg.mxu0
  %v441 = vmax.f32 %v411, 0.0
  %v442 = vmax.f32 %v414, 0.0
  %v443 = vmax.f32 %v419, 0.0
  %v444 = vmax.f32 %v422, 0.0
  %v445 = vmax.f32 %v427, 0.0
  %v446 = vmax.f32 %v430, 0.0
  %v447 = vmax.f32 %v435, 0.0
  %v448 = vmax.f32 %v438, 0.0
  %v449 = vld [vmem:[%s5] sm:$0x1]
  %v450 = vpack.c.bf16 %v442, %v441
  %v451 = vpack.c.bf16 %v444, %v443
  %v452 = vpack.c.bf16 %v446, %v445
  %v453 = vpack.c.bf16 %v448, %v447
  %s454 = sld [smem:[#allocation2]]
  %v455 = vstv %s454
  %v457 = vsel %vm363, %v449, 0
  %459 = vmatprep.subr.bf16.mxu0 0
  %460 = vmatpush1.bf16.msra.mxu0 0
  %461 = vmatprep.subr.bf16.mxu0 0
  %462 = vmatpush1.bf16.msra.mxu0 0
  %463 = vmatprep.subr.bf16.mxu0 0
  %464 = vmatpush1.bf16.msra.mxu0 0
  %465 = vmatprep.subr.bf16.mxu0 0
  %466 = vmatpush1.bf16.msra.mxu0 0
  %467 = vmatprep.subr.bf16.mxu0 0
  %468 = vmatpush1.bf16.msra.mxu0 %v453
  %469 = vmatprep.subr.bf16.mxu0 0
  %470 = vmatpush1.bf16.msra.mxu0 %v452
  %471 = vmatprep.subr.bf16.mxu0 0
  %472 = vmatpush1.bf16.msra.mxu0 %v451
  %473 = vmatprep.subr.bf16.mxu0 0
  %474 = vmatpush1.bf16.msra.mxu0 %v450
  %475 = vmatprep.subr.bf16.mxu0 0
  %476 = vmatpush2.bf16.msra.mxu0 0
  %477 = vmatprep.subr.bf16.mxu0 0
  %478 = vmatpush2.bf16.msra.mxu0 0
  %479 = vmatprep.subr.bf16.mxu0 0
  %480 = vmatpush2.bf16.msra.mxu0 0
  %481 = vmatprep.subr.bf16.mxu0 0
  %482 = vmatpush2.bf16.msra.mxu0 0
  %483 = vmatprep.subr.bf16.mxu0 0
  %484 = vmatpush2.bf16.msra.mxu0 0
  %485 = vmatprep.subr.bf16.mxu0 0
  %486 = vmatpush2.bf16.msra.mxu0 0
  %487 = vmatprep.subr.bf16.mxu0 0
  %488 = vmatpush2.bf16.msra.mxu0 0
  %489 = vmatprep.subr.bf16.mxu0 0
  %490 = vmatpush2.bf16.msra.mxu0 0
  %491 = vmatprep.mubr.bf16.mxu0 0
  %492 = vmatmul.mubr.bf16.gmra.mxu0 %v457
  %v493 = vpop.f32.mrf.mxu0
  %v494 = vadd.f32 %v455, %v493
  %v495 = vpop.f32.mrf.mxu0
  %v496 = vpop.f32.mrf.mxu0
  %v497 = vpop.f32.mrf.mxu0
  %498 = vdwg.mxu0
  %v499 = vxor.u32 %v494, 2147483648
  %v500 = vmul.f32 %v499, 1.442695
  %v501 = vpow.pop %v500
  %v502 = vadd.f32 %v501, 1.0
  %v503 = vrcp.pop %v502
  %v504 = vmul.f32 1.0, %v503
  %505 = vst [vmem:[%s7] sm:$0x1] %v504
  // Predicated region
  $region30: #{cnn_forward.1} parent=0 // pred_check
    _
  $region31: #{cnn_forward.1} parent=0 // pred_check_branch
    %507 = sbr.rel (0) target = $region33
  $region32: #{cnn_forward.1} parent=0 // pred_region
    _
  $region33: #{cnn_forward.1} parent=0 // pred_fallthru
    _
  // Predicated region
  $region34: #{cnn_forward.1} parent=0 // pred_check
    _
  $region35: #{cnn_forward.1} parent=0 // pred_check_branch
    %509 = sbr.rel (0) target = $region37
  $region36: #{cnn_forward.1} parent=0 // pred_region
    _
  $region37: #{cnn_forward.1} parent=0 // pred_fallthru
    _

</llo_original>
